<compile_context>
chip_gen: v6e
topology: v6e:2x2x1
jax: 0.10.0
libtpu: 0.0.40
codegen_flags: <defaults>
</compile_context>

<pallas_src>
import functools

import jax
import jax.numpy as jnp
from jax.experimental import pallas as pl
from jax.experimental.pallas import tpu as pltpu


def _round_up(x, m):
    return (x + m - 1) // m * m


def _tpu_generation_params():
    """Best-effort (vmem_bytes, mxu_native_n) for the local TPU generation."""
    kind = ""
    try:
        kind = jax.devices()[0].device_kind.lower()
    except Exception:
        pass
    vmem_bytes = None
    try:
        vmem_bytes = int(pltpu.get_tpu_info().vmem_capacity_bytes)
    except Exception:
        pass
    if vmem_bytes is None:
        # v5e / v6e: 128 MiB VMEM per TensorCore; v7x: 64 MiB (conservative default).
        older = any(g in kind for g in ("v2", "v3", "v4", "v5", "v6"))
        vmem_bytes = (128 << 20) if older else (64 << 20)
    # v6e / v7x MXUs are 256x256; v5e and earlier are 128x128.
    mxu_n = 128 if any(g in kind for g in ("v2", "v3", "v4", "v5")) else 256
    return vmem_bytes, mxu_n


def _vmem_budget_and_limit(vmem_bytes):
    # Leave headroom below physical VMEM for Mosaic's own scratch; cap the
    # scoped limit at 96 MiB and self-impose a smaller tile-selection budget.
    limit = min(max(vmem_bytes - (16 << 20), 32 << 20), 96 << 20)
    budget = min(48 << 20, (limit * 3) // 4)
    return budget, limit


def _patch_embed_kernel(p_ref, w_ref, b_ref, o_ref):
    # (tm, Kp) @ (Kp, tn) on the MXU, f32 accumulation, + bias, lane-dense store.
    acc = jnp.dot(p_ref[...], w_ref[...], preferred_element_type=jnp.float32)
    o_ref[...] = (acc + b_ref[...]).astype(o_ref.dtype)


def prepare_patch_embed_params(weight, bias, *, compute_dtype=jnp.bfloat16,
                               e_align=None):
    """One-time parameter prep (hoisted out of the per-call path).

    weight : (embed_dim, C, ph, pw)  -- PyTorch Conv2d layout
    bias   : (embed_dim,)
    e_align: lane alignment for embed_dim.  Defaults to the MXU-native width
             (256 on v6e/v7x, 128 on v5e and older).
    Returns (w2d_padded[compute_dtype] of shape (Kp, Ep),
             bias2d_padded[f32] of shape (1, Ep)).
    """
    if e_align is None:
        _, e_align = _tpu_generation_params()
    embed_dim, C, ph, pw = weight.shape
    K = C * ph * pw
    Kp = _round_up(K, 128)
    Ep = _round_up(embed_dim, e_align)
    w2d = weight.reshape(embed_dim, K).T                      # (K, E), (C,ph,pw)-major rows
    w2d = jnp.pad(w2d, ((0, Kp - K), (0, Ep - embed_dim)))
    b2d = jnp.pad(bias.reshape(1, embed_dim).astype(jnp.float32),
                  ((0, 0), (0, Ep - embed_dim)))
    return w2d.astype(compute_dtype), b2d


def _choose_tiles(M, Kp, Ep, *, in_itemsize, out_itemsize, vmem_budget):
    """Pick (tm, tn) under an explicit VMEM budget (double-buffered pipeline)."""

    def need(tm, tn):
        return 2 * (tm * Kp * in_itemsize      # patch tile
                    + Kp * tn * in_itemsize    # weight tile
                    + tn * 4                   # bias tile
                    + tm * tn * out_itemsize)  # output tile

    # tn: largest E-tile (most weight reuse, lane-dense stores) that still
    # leaves room for >= 256-row patch/output tiles.  tn == Ep means the
    # weight block index is constant and the weight is DMA'd exactly once.
    cands = sorted({c for c in (Ep, 2048, 1024, 512, 256, 128)
                    if c <= Ep and Ep % c == 0}, reverse=True)
    tn = cands[-1]
    for cand in cands:
        if need(256, cand) <= vmem_budget:
            tn = cand
            break

    # tm: biggest of {512, 256, 128} whose working set fits the budget.
    M8 = _round_up(max(M, 1), 8)
    tm = 128
    for cand in (512, 256, 128):
        if need(cand, tn) <= vmem_budget:
            tm = cand
            break
    tm = min(tm, M8)                              # never a giant single block
    # Keep >= 2 grid steps along M when there is enough work (megacore /
    # v7x's two TensorCores), rounded to a clean multiple of 128.
    if M8 > 256 and pl.cdiv(M8, tm) < 2:
        tm = max(128, _round_up(pl.cdiv(M8, 2), 128))
    return tm, tn


def patch_embed_forward(x, w2d_p, b2d_p, *, embed_dim, patch_size, stride,
                        flatten=True, compute_dtype=jnp.bfloat16,
                        out_dtype=jnp.bfloat16):
    """Forward pass of PatchEmbed.

    x      : (B, C, H, W) NCHW (same as the PyTorch module)
    w2d_p  : prepared weight from prepare_patch_embed_params, shape (Kp, Ep)
    b2d_p  : prepared bias, shape (1, Ep) f32
    Returns (B, num_patches, embed_dim) [out_dtype] if flatten
            else (B, embed_dim, gh, gw).
    """
    B, C, H, W = x.shape
    ph, pw = patch_size
    assert (ph, pw) == tuple(stride), "kernel assumes stride == patch_size"
    assert H % ph == 0 and W % pw == 0
    gh, gw = H // ph, W // pw
    num_patches = gh * gw
    K = C * ph * pw
    Kp, Ep = w2d_p.shape
    assert Kp == _round_up(K, 128) and Ep >= embed_dim and Ep % 128 == 0

    M = B * num_patches
    in_itemsize = jnp.dtype(compute_dtype).itemsize
    out_itemsize = jnp.dtype(out_dtype).itemsize
    vmem_bytes, _ = _tpu_generation_params()
    vmem_budget, vmem_limit = _vmem_budget_and_limit(vmem_bytes)
    tm, tn = _choose_tiles(M, Kp, Ep, in_itemsize=in_itemsize,
                           out_itemsize=out_itemsize, vmem_budget=vmem_budget)

    # --- im2col in (C, ph, pw) order, matching the Conv2d weight layout -----
    # Cast to the compute dtype FIRST so that, if XLA materializes this copy,
    # it moves bf16 rather than f32.  allow_input_fusion below lets XLA fold
    # the chain into the pallas_call input pipeline when it can.
    patches = x.astype(compute_dtype).reshape(B, C, gh, ph, gw, pw)
    patches = jnp.transpose(patches, (0, 2, 4, 1, 3, 5)).reshape(M, K)
    if Kp != K:
        patches = jnp.pad(patches, ((0, 0), (0, Kp - K)))

    n_m_blocks = pl.cdiv(M, tm)
    grid = (n_m_blocks, Ep // tn)
    flops = 2 * M * Kp * Ep
    # With E blocked (tn < Ep) the weight is re-fetched once per M block.
    weight_bytes = Kp * Ep * in_itemsize * (1 if tn == Ep else n_m_blocks)
    bytes_accessed = (M * Kp * in_itemsize + weight_bytes + Ep * 4
                      + M * Ep * out_itemsize)

    out2d = pl.pallas_call(
        _patch_embed_kernel,
        out_shape=jax.ShapeDtypeStruct((M, Ep), out_dtype),
        grid_spec=pltpu.PrefetchScalarGridSpec(
            num_scalar_prefetch=0,
            grid=grid,
            in_specs=[
                pl.BlockSpec((tm, Kp), lambda i, j: (i, 0)),   # patch rows
                pl.BlockSpec((Kp, tn), lambda i, j: (0, j)),   # weight tile
                pl.BlockSpec((1, tn), lambda i, j: (0, j)),    # bias tile (f32)
            ],
            out_specs=pl.BlockSpec((tm, tn), lambda i, j: (i, j)),
        ),
        compiler_params=pltpu.CompilerParams(
            dimension_semantics=("parallel", "parallel"),
            vmem_limit_bytes=vmem_limit,
            allow_input_fusion=[True, False, False],
        ),
        cost_estimate=pl.CostEstimate(
            flops=flops, transcendentals=0, bytes_accessed=bytes_accessed),
    )(patches, w2d_p, b2d_p)

    out = out2d if Ep == embed_dim else out2d[:, :embed_dim]
    out = out.reshape(B, num_patches, embed_dim)
    if not flatten:
        out = out.reshape(B, gh, gw, embed_dim).transpose(0, 3, 1, 2)
    # norm_layer=None -> nn.Identity(): nothing to do.
    return out


def _reference_forward(x, weight, bias, *, patch_size, stride):
    """Pure-JAX reference: Conv2d(stride=patch) + flatten(2).transpose(1,2)."""
    y = jax.lax.conv_general_dilated(
        x, weight, window_strides=stride, padding="VALID",
        dimension_numbers=("NCHW", "OIHW", "NCHW"))
    y = y + bias.reshape(1, -1, 1, 1)
    B, E, gh, gw = y.shape
    return y.reshape(B, E, gh * gw).transpose(0, 2, 1)


if __name__ == "__main__":
    # Small shapes consistent with the module:
    #   img_size=(16,16), patch_size=(8,8), stride=(8,8), in_chans=4, embed_dim=32
    B, C, H, W = 2, 4, 16, 16
    patch_size = (8, 8)
    stride = (8, 8)
    embed_dim = 32

    key = jax.random.PRNGKey(0)
    kx, kw, kb = jax.random.split(key, 3)
    x = jax.random.normal(kx, (B, C, H, W), dtype=jnp.float32)
    # Deterministic synthetic parameters (PyTorch Conv2d weight layout).
    weight = 0.02 * jax.random.normal(kw, (embed_dim, C, *patch_size), dtype=jnp.float32)
    bias = 0.01 * jax.random.normal(kb, (embed_dim,), dtype=jnp.float32)

    # One-time parameter prep (hoisted weight transpose/pad/cast).
    w2d_p, b2d_p = jax.block_until_ready(prepare_patch_embed_params(weight, bias))

    fwd = jax.jit(functools.partial(
        patch_embed_forward, embed_dim=embed_dim,
        patch_size=patch_size, stride=stride))
    out = jax.block_until_ready(fwd(x, w2d_p, b2d_p))

    ref = _reference_forward(x, weight, bias, patch_size=patch_size, stride=stride)
    assert out.shape == (B, (H // patch_size[0]) * (W // patch_size[1]), embed_dim)
    # bf16 inputs/outputs with f32 accumulation: tolerance reflects bf16 rounding.
    assert jnp.allclose(out.astype(jnp.float32), ref, atol=2e-2, rtol=2e-2), \
        "mismatch vs reference conv"

    print("KERNEL_OK")
</pallas_src>

<mosaic_0001>
module attributes {stable_mosaic.version = 11 : i64} {
  func.func @_patch_embed_kernel(%arg0: i32, %arg1: i32, %arg2: memref<8x256xbf16, #tpu.memory_space<vmem>>, %arg3: memref<256x256xbf16, #tpu.memory_space<vmem>>, %arg4: memref<1x256xf32, #tpu.memory_space<vmem>>, %arg5: memref<8x256xbf16, #tpu.memory_space<vmem>>) attributes {dimension_semantics = [#tpu.dimension_semantics<parallel>, #tpu.dimension_semantics<parallel>], iteration_bounds = array<i64: 1, 1>, scalar_prefetch = 0 : i64, scratch_operands = 0 : i64, tpu.core_type = #tpu.core_type<tc>, window_params = [{transform_indices = @transform_0, window_bounds = array<i64: 8, 256>}, {transform_indices = @transform_1, window_bounds = array<i64: 256, 256>}, {transform_indices = @transform_2, window_bounds = array<i64: 1, 256>}, {transform_indices = @transform_3, window_bounds = array<i64: 8, 256>}]} {
    %c0 = arith.constant 0 : index
    %c0_0 = arith.constant 0 : index
    %0 = vector.load %arg2[%c0, %c0_0] : memref<8x256xbf16, #tpu.memory_space<vmem>>, vector<8x256xbf16>
    %c0_1 = arith.constant 0 : index
    %c0_2 = arith.constant 0 : index
    %1 = vector.load %arg3[%c0_1, %c0_2] : memref<256x256xbf16, #tpu.memory_space<vmem>>, vector<256x256xbf16>
    %cst = arith.constant dense<0.000000e+00> : vector<8x256xf32>
    %2 = tpu.matmul %0, %1, %cst {dimension_numbers = #tpu.dot_dimension_numbers<[1], [0], [0], [1], [0, 0, 1, 1], [], []>} : vector<8x256xbf16>, vector<256x256xbf16>, vector<8x256xf32> -> vector<8x256xf32>
    %c0_3 = arith.constant 0 : index
    %c0_4 = arith.constant 0 : index
    %3 = vector.load %arg4[%c0_3, %c0_4] : memref<1x256xf32, #tpu.memory_space<vmem>>, vector<1x256xf32>
    %4 = vector.broadcast %3 : vector<1x256xf32> to vector<8x256xf32>
    %5 = arith.addf %2, %4 : vector<8x256xf32>
    %6 = arith.truncf %5 : vector<8x256xf32> to vector<8x256xbf16>
    %c0_5 = arith.constant 0 : index
    %c0_6 = arith.constant 0 : index
    %7 = vector.load %arg5[%c0_5, %c0_6] : memref<8x256xbf16, #tpu.memory_space<vmem>>, vector<8x256xbf16>
    tpu.vector_store %arg5[%c0_5, %c0_6], %6 {strides = array<i32>} : memref<8x256xbf16, #tpu.memory_space<vmem>>, vector<8x256xbf16>,
    return
  }
  func.func @transform_0(%arg0: i32, %arg1: i32) -> (i32, i32) {
    %c0_i32 = arith.constant 0 : i32
    %c0_i32_0 = arith.constant 0 : i32
    return %arg0, %c0_i32 : i32, i32
  }
  func.func @transform_1(%arg0: i32, %arg1: i32) -> (i32, i32) {
    %c0_i32 = arith.constant 0 : i32
    %c0_i32_0 = arith.constant 0 : i32
    return %c0_i32, %arg1 : i32, i32
  }
  func.func @transform_2(%arg0: i32, %arg1: i32) -> (i32, i32) {
    %c0_i32 = arith.constant 0 : i32
    %c0_i32_0 = arith.constant 0 : i32
    return %c0_i32, %arg1 : i32, i32
  }
  func.func @transform_3(%arg0: i32, %arg1: i32) -> (i32, i32) {
    %c0_i32 = arith.constant 0 : i32
    return %arg0, %arg1 : i32, i32
  }
}

</mosaic_0001>

<llo_original>
// kernel: patch_embed_forward.1
$region0: #{patch_embed_forward.1}
  #allocation0 [shape = 'u32[]', space=smem, size = 0x4, offset = 0x4, fixed_abs, tag = 'smem constant byte address 0x4 - core index']
  #allocation1 [shape = 'u32[144,128]{1,0:T(1,128)}', space=vmem, size = 0x12000, scoped, tag = 'internal scratch']
  %s0 = inlined_call_operand.vmem [shape: bf16[8,256], index: 0, kind: input, shape index: {}]
  %s1 = inlined_call_operand.vmem [shape: bf16[256,256], index: 1, kind: input, shape index: {}]
  %s2 = inlined_call_operand.vmem [shape: f32[1,256], index: 2, kind: input, shape index: {}]
  %s3 = inlined_call_operand.vmem [shape: bf16[8,256], index: 3, kind: output, shape index: {}]
  %s4 = sld [smem:[#allocation0]]
  $region22: #{patch_embed_forward.1} parent=0
    _
  %s6 = ssub.s32 1, %s4
  %s7 = scalar_select 0, %s6, %s4
  // Predicated region
  $region2: #{patch_embed_forward.1} parent=0 // pred_check
    _
  $region3: #{patch_embed_forward.1} parent=0 // pred_check_branch
    %9 = sbr.rel (0) target = $region5
  $region4: #{patch_embed_forward.1} parent=0 // pred_region
    _
  $region5: #{patch_embed_forward.1} parent=0 // pred_fallthru
    _
  // Predicated region
  $region6: #{patch_embed_forward.1} parent=0 // pred_check
    _
  $region7: #{patch_embed_forward.1} parent=0 // pred_check_branch
    %11 = sbr.rel (0) target = $region9
  $region8: #{patch_embed_forward.1} parent=0 // pred_region
    _
  $region9: #{patch_embed_forward.1} parent=0 // pred_fallthru
    _
  // Predicated region
  $region10: #{patch_embed_forward.1} parent=0 // pred_check
    _
  $region11: #{patch_embed_forward.1} parent=0 // pred_check_branch
    %13 = sbr.rel (0) target = $region13
  $region12: #{patch_embed_forward.1} parent=0 // pred_region
    _
  $region13: #{patch_embed_forward.1} parent=0 // pred_fallthru
    _
  %v14 = vld [vmem:[%s0] sm:$0xff]
  %v15 = vld [vmem:[%s1] sm:$0xff]
  %v16 = vld [vmem:[%s1 + $0x8] sm:$0xff]
  %v17 = vld [vmem:[%s1 + $0x10] sm:$0xff]
  %v18 = vld [vmem:[%s1 + $0x18] sm:$0xff]
  %v19 = vld [vmem:[%s1 + $0x20] sm:$0xff]
  %v20 = vld [vmem:[%s1 + $0x28] sm:$0xff]
  %v21 = vld [vmem:[%s1 + $0x30] sm:$0xff]
  %v22 = vld [vmem:[%s1 + $0x38] sm:$0xff]
  %v23 = vld [vmem:[%s1 + $0x40] sm:$0xff]
  %v24 = vld [vmem:[%s1 + $0x48] sm:$0xff]
  %v25 = vld [vmem:[%s1 + $0x50] sm:$0xff]
  %v26 = vld [vmem:[%s1 + $0x58] sm:$0xff]
  %v27 = vld [vmem:[%s1 + $0x60] sm:$0xff]
  %v28 = vld [vmem:[%s1 + $0x68] sm:$0xff]
  %v29 = vld [vmem:[%s1 + $0x70] sm:$0xff]
  %v30 = vld [vmem:[%s1 + $0x78] sm:$0xff]
  %v31 = vld [vmem:[%s1 + $0x80] sm:$0xff]
  %v32 = vld [vmem:[%s1 + $0x88] sm:$0xff]
  %v33 = vld [vmem:[%s1 + $0x90] sm:$0xff]
  %v34 = vld [vmem:[%s1 + $0x98] sm:$0xff]
  %v35 = vld [vmem:[%s1 + $0xa0] sm:$0xff]
  %v36 = vld [vmem:[%s1 + $0xa8] sm:$0xff]
  %v37 = vld [vmem:[%s1 + $0xb0] sm:$0xff]
  %v38 = vld [vmem:[%s1 + $0xb8] sm:$0xff]
  %v39 = vld [vmem:[%s1 + $0xc0] sm:$0xff]
  %v40 = vld [vmem:[%s1 + $0xc8] sm:$0xff]
  %v41 = vld [vmem:[%s1 + $0xd0] sm:$0xff]
  %v42 = vld [vmem:[%s1 + $0xd8] sm:$0xff]
  %v43 = vld [vmem:[%s1 + $0xe0] sm:$0xff]
  %v44 = vld [vmem:[%s1 + $0xe8] sm:$0xff]
  %v45 = vld [vmem:[%s1 + $0xf0] sm:$0xff]
  %v46 = vld [vmem:[%s1 + $0xf8] sm:$0xff]
  %v47 = vld [vmem:[%s2] sm:$0x3]
  %v49 = vlaneseq
  %v50 = vshrl.u32 %v49, 7
  %v51 = vsub.s32 0, %v50
  %v52 = vrot.slane %v47, %v51
  %v53 = vlaneseq
  %v54 = vshrl.u32 %v53, 7
  %v55 = vsub.s32 1, %v54
  %v56 = vrot.slane %v47, %v55
  %v60 = vunpack.c.l.b16 %v14
  %v61 = vunpack.c.h.b16 %v14
  %v62 = vpack.c.b16 %v60, %v60
  %v63 = vpack.c.b16 %v61, %v61
  %v98 = vunpack.c.l.b16 %v15
  %v99 = vunpack.c.h.b16 %v15
  %v100 = vunpack.c.l.b16 %v16
  %v101 = vunpack.c.h.b16 %v16
  %v102 = vunpack.c.l.b16 %v17
  %v103 = vunpack.c.h.b16 %v17
  %v104 = vunpack.c.l.b16 %v18
  %v105 = vunpack.c.h.b16 %v18
  %v106 = vunpack.c.l.b16 %v19
  %v107 = vunpack.c.h.b16 %v19
  %v108 = vunpack.c.l.b16 %v20
  %v109 = vunpack.c.h.b16 %v20
  %v110 = vunpack.c.l.b16 %v21
  %v111 = vunpack.c.h.b16 %v21
  %v112 = vunpack.c.l.b16 %v22
  %v113 = vunpack.c.h.b16 %v22
  %v114 = vunpack.c.l.b16 %v23
  %v115 = vunpack.c.h.b16 %v23
  %v116 = vunpack.c.l.b16 %v24
  %v117 = vunpack.c.h.b16 %v24
  %v118 = vunpack.c.l.b16 %v25
  %v119 = vunpack.c.h.b16 %v25
  %v120 = vunpack.c.l.b16 %v26
  %v121 = vunpack.c.h.b16 %v26
  %v122 = vunpack.c.l.b16 %v27
  %v123 = vunpack.c.h.b16 %v27
  %v124 = vunpack.c.l.b16 %v28
  %v125 = vunpack.c.h.b16 %v28
  %v126 = vunpack.c.l.b16 %v29
  %v127 = vunpack.c.h.b16 %v29
  %v128 = vunpack.c.l.b16 %v30
  %v129 = vunpack.c.h.b16 %v30
  %v130 = vunpack.c.l.b16 %v31
  %v131 = vunpack.c.h.b16 %v31
  %v132 = vunpack.c.l.b16 %v32
  %v133 = vunpack.c.h.b16 %v32
  %v134 = vunpack.c.l.b16 %v33
  %v135 = vunpack.c.h.b16 %v33
  %v136 = vunpack.c.l.b16 %v34
  %v137 = vunpack.c.h.b16 %v34
  %v138 = vunpack.c.l.b16 %v35
  %v139 = vunpack.c.h.b16 %v35
  %v140 = vunpack.c.l.b16 %v36
  %v141 = vunpack.c.h.b16 %v36
  %v142 = vunpack.c.l.b16 %v37
  %v143 = vunpack.c.h.b16 %v37
  %v144 = vunpack.c.l.b16 %v38
  %v145 = vunpack.c.h.b16 %v38
  %v146 = vunpack.c.l.b16 %v39
  %v147 = vunpack.c.h.b16 %v39
  %v148 = vunpack.c.l.b16 %v40
  %v149 = vunpack.c.h.b16 %v40
  %v150 = vunpack.c.l.b16 %v41
  %v151 = vunpack.c.h.b16 %v41
  %v152 = vunpack.c.l.b16 %v42
  %v153 = vunpack.c.h.b16 %v42
  %v154 = vunpack.c.l.b16 %v43
  %v155 = vunpack.c.h.b16 %v43
  %v156 = vunpack.c.l.b16 %v44
  %v157 = vunpack.c.h.b16 %v44
  %v158 = vunpack.c.l.b16 %v45
  %v159 = vunpack.c.h.b16 %v45
  %v160 = vunpack.c.l.b16 %v46
  %v161 = vunpack.c.h.b16 %v46
  %v162 = vpack.c.b16 %v100, %v98
  %v163 = vpack.c.b16 %v101, %v99
  %v164 = vpack.c.b16 %v104, %v102
  %v165 = vpack.c.b16 %v105, %v103
  %v166 = vpack.c.b16 %v108, %v106
  %v167 = vpack.c.b16 %v109, %v107
  %v168 = vpack.c.b16 %v112, %v110
  %v169 = vpack.c.b16 %v113, %v111
  %v170 = vpack.c.b16 %v116, %v114
  %v171 = vpack.c.b16 %v117, %v115
  %v172 = vpack.c.b16 %v120, %v118
  %v173 = vpack.c.b16 %v121, %v119
  %v174 = vpack.c.b16 %v124, %v122
  %v175 = vpack.c.b16 %v125, %v123
  %v176 = vpack.c.b16 %v128, %v126
  %v177 = vpack.c.b16 %v129, %v127
  %v178 = vpack.c.b16 %v132, %v130
  %v179 = vpack.c.b16 %v133, %v131
  %v180 = vpack.c.b16 %v136, %v134
  %v181 = vpack.c.b16 %v137, %v135
  %v182 = vpack.c.b16 %v140, %v138
  %v183 = vpack.c.b16 %v141, %v139
  %v184 = vpack.c.b16 %v144, %v142
  %v185 = vpack.c.b16 %v145, %v143
  %v186 = vpack.c.b16 %v148, %v146
  %v187 = vpack.c.b16 %v149, %v147
  %v188 = vpack.c.b16 %v152, %v150
  %v189 = vpack.c.b16 %v153, %v151
  %v190 = vpack.c.b16 %v156, %v154
  %v191 = vpack.c.b16 %v157, %v155
  %v192 = vpack.c.b16 %v160, %v158
  %v193 = vpack.c.b16 %v161, %v159
  %226 = vmatprep.subr.bf16.mxu0 %v177
  %227 = vmatpush1.bf16.msra.mxu0 %v176
  %228 = vmatprep.subr.bf16.mxu0 %v175
  %229 = vmatpush1.bf16.msra.mxu0 %v174
  %230 = vmatprep.subr.bf16.mxu0 %v173
  %231 = vmatpush1.bf16.msra.mxu0 %v172
  %232 = vmatprep.subr.bf16.mxu0 %v171
  %233 = vmatpush1.bf16.msra.mxu0 %v170
  %234 = vmatprep.subr.bf16.mxu0 %v169
  %235 = vmatpush1.bf16.msra.mxu0 %v168
  %236 = vmatprep.subr.bf16.mxu0 %v167
  %237 = vmatpush1.bf16.msra.mxu0 %v166
  %238 = vmatprep.subr.bf16.mxu0 %v165
  %239 = vmatpush1.bf16.msra.mxu0 %v164
  %240 = vmatprep.subr.bf16.mxu0 %v163
  %241 = vmatpush1.bf16.msra.mxu0 %v162
  %242 = vmatprep.subr.bf16.mxu0 %v193
  %243 = vmatpush2.bf16.msra.mxu0 %v192
  %244 = vmatprep.subr.bf16.mxu0 %v191
  %245 = vmatpush2.bf16.msra.mxu0 %v190
  %246 = vmatprep.subr.bf16.mxu0 %v189
  %247 = vmatpush2.bf16.msra.mxu0 %v188
  %248 = vmatprep.subr.bf16.mxu0 %v187
  %249 = vmatpush2.bf16.msra.mxu0 %v186
  %250 = vmatprep.subr.bf16.mxu0 %v185
  %251 = vmatpush2.bf16.msra.mxu0 %v184
  %252 = vmatprep.subr.bf16.mxu0 %v183
  %253 = vmatpush2.bf16.msra.mxu0 %v182
  %254 = vmatprep.subr.bf16.mxu0 %v181
  %255 = vmatpush2.bf16.msra.mxu0 %v180
  %256 = vmatprep.subr.bf16.mxu0 %v179
  %257 = vmatpush2.bf16.msra.mxu0 %v178
  %258 = vmatprep.mubr.bf16.mxu0 %v63
  %259 = vmatmul.mubr.bf16.gmra.mxu0 %v62
  %v260 = vpop.f32.mrf.mxu0
  %v261 = vadd.f32 %v52, %v260
  %v262 = vpop.f32.mrf.mxu0
  %v263 = vadd.f32 %v56, %v262
  %v264 = vpop.f32.mrf.mxu0
  %v265 = vpop.f32.mrf.mxu0
  %266 = vdwg.mxu0
  %v267 = vpack.c.bf16 %v261, %v261
  %v268 = vpack.c.bf16 %v263, %v263
  %v271 = vunpack.c.l.b16 %v267
  %v272 = vunpack.c.l.b16 %v268
  %v273 = vpack.c.b16 %v272, %v271
  %275 = vst [vmem:[%s3] sm:$0xff] %v273
  // Predicated region
  $region14: #{patch_embed_forward.1} parent=0 // pred_check
    _
  $region15: #{patch_embed_forward.1} parent=0 // pred_check_branch
    %277 = sbr.rel (0) target = $region17
  $region16: #{patch_embed_forward.1} parent=0 // pred_region
    _
  $region17: #{patch_embed_forward.1} parent=0 // pred_fallthru
    _
  // Predicated region
  $region18: #{patch_embed_forward.1} parent=0 // pred_check
    _
  $region19: #{patch_embed_forward.1} parent=0 // pred_check_branch
    %279 = sbr.rel (0) target = $region21
  $region20: #{patch_embed_forward.1} parent=0 // pred_region
    _
  $region21: #{patch_embed_forward.1} parent=0 // pred_fallthru
    _

</llo_original>
